<compile_context>
chip_gen: v6e
topology: v6e:2x2x1
jax: 0.10.0
libtpu: 0.0.40
codegen_flags: <defaults>
</compile_context>

<pallas_src>
import functools

import jax
import jax.numpy as jnp
from jax.experimental import pallas as pl
from jax.experimental.pallas import tpu as pltpu


def _round_up(x: int, m: int) -> int:
    return ((x + m - 1) // m) * m


def dqn_mlp_kernel(x_ref,
                   w1_ref, b1_ref,
                   w2_ref, b2_ref,
                   w3_ref, b3_ref,
                   w4_ref, b4_ref,
                   o_ref):
    """Fused forward pass for one batch tile: three ReLU Linear layers + final Linear.

    x_ref and all w*_ref are bf16; accumulation and bias/ReLU are f32.
    """
    # fc1 + ReLU  (dropout in eval mode -> identity)
    h = jnp.dot(x_ref[...], w1_ref[...],
                preferred_element_type=jnp.float32) + b1_ref[...]
    h = jnp.maximum(h, 0.0)

    # fc2 + ReLU  (dropout in eval mode -> identity)
    h = jnp.dot(h.astype(jnp.bfloat16), w2_ref[...],
                preferred_element_type=jnp.float32) + b2_ref[...]
    h = jnp.maximum(h, 0.0)

    # fc3 + ReLU
    h = jnp.dot(h.astype(jnp.bfloat16), w3_ref[...],
                preferred_element_type=jnp.float32) + b3_ref[...]
    h = jnp.maximum(h, 0.0)

    # fc4 (no activation)
    out = jnp.dot(h.astype(jnp.bfloat16), w4_ref[...],
                  preferred_element_type=jnp.float32) + b4_ref[...]
    o_ref[...] = out.astype(o_ref.dtype)


@functools.partial(jax.jit, static_argnames=("block_batch",))
def dqn_forward(x, params, *, block_batch: int = 512):
    """Batch-tiled fused MLP forward.

    x:       (B, state_size) float32 (cast to bf16 for streaming).
    params:  ((w1,b1),(w2,b2),(w3,b3),(w4,b4)); w is (in, out) (pre-transposed
             vs. PyTorch), b is (1, out). Weights are cast to bf16, biases stay f32.
    Returns: (B, action_size) float32 Q-values.
    """
    (w1, b1), (w2, b2), (w3, b3), (w4, b4) = params
    B, state_size = x.shape
    action_size = w4.shape[1]

    # Batch tile: multiple of 8 sublanes, capped at block_batch.
    tb = min(block_batch, max(8, _round_up(B, 8)))
    num_blocks = pl.cdiv(B, tb)
    padded_b = num_blocks * tb

    x_bf = x.astype(jnp.bfloat16)
    if padded_b != B:
        x_bf = jnp.pad(x_bf, ((0, padded_b - B), (0, 0)))

    w1b, w2b, w3b, w4b = (w.astype(jnp.bfloat16) for w in (w1, w2, w3, w4))

    # Weights/biases: full-array blocks with constant index maps -> loaded once,
    # resident in VMEM across all grid steps. x/out: blocked over batch.
    const = lambda i: (0, 0)
    in_specs = [
        pl.BlockSpec((tb, state_size), lambda i: (i, 0)),   # x tile
        pl.BlockSpec(w1b.shape, const), pl.BlockSpec(b1.shape, const),
        pl.BlockSpec(w2b.shape, const), pl.BlockSpec(b2.shape, const),
        pl.BlockSpec(w3b.shape, const), pl.BlockSpec(b3.shape, const),
        pl.BlockSpec(w4b.shape, const), pl.BlockSpec(b4.shape, const),
    ]
    out_spec = pl.BlockSpec((tb, action_size), lambda i: (i, 0))

    out = pl.pallas_call(
        dqn_mlp_kernel,
        out_shape=jax.ShapeDtypeStruct((padded_b, action_size), jnp.float32),
        grid=(num_blocks,),
        in_specs=in_specs,
        out_specs=out_spec,
        compiler_params=pltpu.CompilerParams(
            dimension_semantics=("parallel",),   # megacore sharding on v7x
        ),
    )(x_bf, w1b, b1, w2b, b2, w3b, b3, w4b, b4)

    return out[:B]


def init_linear(key, in_features, out_features):
    """PyTorch-style Linear init: U(-1/sqrt(in), 1/sqrt(in)).

    Weight returned already transposed to (in_features, out_features);
    bias is (1, out_features) for lane-broadcast inside the kernel.
    """
    kw, kb = jax.random.split(key)
    bound = 1.0 / jnp.sqrt(jnp.float32(in_features))
    w = jax.random.uniform(kw, (in_features, out_features), jnp.float32, -bound, bound)
    b = jax.random.uniform(kb, (1, out_features), jnp.float32, -bound, bound)
    return w, b


def ref_forward(x, params):
    """Plain-JAX reference with the same bf16-weight / f32-accum numerics."""
    h = x.astype(jnp.bfloat16)
    for i, (w, b) in enumerate(params):
        h = jnp.dot(h, w.astype(jnp.bfloat16),
                    preferred_element_type=jnp.float32) + b
        if i < 3:
            h = jnp.maximum(h, 0.0).astype(jnp.bfloat16)
    return h


if __name__ == "__main__":
    # Small shapes consistent with DQNNetwork(state_size, action_size, hidden_size=32)
    batch = 2
    state_size = 8
    hidden_size = 32
    action_size = 4

    key = jax.random.PRNGKey(0)
    k_x, k1, k2, k3, k4 = jax.random.split(key, 5)

    x = jax.random.normal(k_x, (batch, state_size), jnp.float32)

    params = (
        init_linear(k1, state_size, hidden_size),
        init_linear(k2, hidden_size, hidden_size),
        init_linear(k3, hidden_size, hidden_size),
        init_linear(k4, hidden_size, action_size),
    )

    out = dqn_forward(x, params)
    jax.block_until_ready(out)

    ref = ref_forward(x, params)
    assert out.shape == (batch, action_size)
    assert jnp.allclose(out, ref, atol=2e-3, rtol=2e-3), "Pallas kernel mismatch vs reference"

    # Also exercise a larger, multi-tile batch to cover the gridded path.
    big_b = 1040  # non-multiple of the tile -> exercises padding + slicing
    xb = jax.random.normal(jax.random.PRNGKey(1), (big_b, state_size), jnp.float32)
    out_big = dqn_forward(xb, params)
    jax.block_until_ready(out_big)
    ref_big = ref_forward(xb, params)
    assert out_big.shape == (big_b, action_size)
    assert jnp.allclose(out_big, ref_big, atol=2e-3, rtol=2e-3), "large-batch mismatch"

    print("KERNEL_OK")
</pallas_src>

<mosaic_0001>
module attributes {stable_mosaic.version = 11 : i64} {
  func.func @dqn_mlp_kernel(%arg0: i32, %arg1: memref<8x8xbf16, #tpu.memory_space<vmem>>, %arg2: memref<8x32xbf16, #tpu.memory_space<vmem>>, %arg3: memref<1x32xf32, #tpu.memory_space<vmem>>, %arg4: memref<32x32xbf16, #tpu.memory_space<vmem>>, %arg5: memref<1x32xf32, #tpu.memory_space<vmem>>, %arg6: memref<32x32xbf16, #tpu.memory_space<vmem>>, %arg7: memref<1x32xf32, #tpu.memory_space<vmem>>, %arg8: memref<32x4xbf16, #tpu.memory_space<vmem>>, %arg9: memref<1x4xf32, #tpu.memory_space<vmem>>, %arg10: memref<8x4xf32, #tpu.memory_space<vmem>>) attributes {dimension_semantics = [#tpu.dimension_semantics<parallel>], iteration_bounds = array<i64: 1>, scalar_prefetch = 0 : i64, scratch_operands = 0 : i64, tpu.core_type = #tpu.core_type<tc>, window_params = [{transform_indices = @transform_0, window_bounds = array<i64: 8, 8>}, {pipeline_mode = #tpu.pipeline_mode<synchronous>, transform_indices = @transform_1, window_bounds = array<i64: 8, 32>}, {pipeline_mode = #tpu.pipeline_mode<synchronous>, transform_indices = @transform_2, window_bounds = array<i64: 1, 32>}, {pipeline_mode = #tpu.pipeline_mode<synchronous>, transform_indices = @transform_3, window_bounds = array<i64: 32, 32>}, {pipeline_mode = #tpu.pipeline_mode<synchronous>, transform_indices = @transform_4, window_bounds = array<i64: 1, 32>}, {pipeline_mode = #tpu.pipeline_mode<synchronous>, transform_indices = @transform_5, window_bounds = array<i64: 32, 32>}, {pipeline_mode = #tpu.pipeline_mode<synchronous>, transform_indices = @transform_6, window_bounds = array<i64: 1, 32>}, {pipeline_mode = #tpu.pipeline_mode<synchronous>, transform_indices = @transform_7, window_bounds = array<i64: 32, 4>}, {pipeline_mode = #tpu.pipeline_mode<synchronous>, transform_indices = @transform_8, window_bounds = array<i64: 1, 4>}, {transform_indices = @transform_9, window_bounds = array<i64: 8, 4>}]} {
    %c0 = arith.constant 0 : index
    %c0_0 = arith.constant 0 : index
    %0 = vector.load %arg1[%c0, %c0_0] : memref<8x8xbf16, #tpu.memory_space<vmem>>, vector<8x8xbf16>
    %c0_1 = arith.constant 0 : index
    %c0_2 = arith.constant 0 : index
    %1 = vector.load %arg2[%c0_1, %c0_2] : memref<8x32xbf16, #tpu.memory_space<vmem>>, vector<8x32xbf16>
    %cst = arith.constant dense<0.000000e+00> : vector<8x32xf32>
    %2 = tpu.matmul %0, %1, %cst {dimension_numbers = #tpu.dot_dimension_numbers<[1], [0], [0], [1], [0, 0, 1, 1], [], []>} : vector<8x8xbf16>, vector<8x32xbf16>, vector<8x32xf32> -> vector<8x32xf32>
    %c0_3 = arith.constant 0 : index
    %c0_4 = arith.constant 0 : index
    %3 = vector.load %arg3[%c0_3, %c0_4] : memref<1x32xf32, #tpu.memory_space<vmem>>, vector<1x32xf32>
    %4 = vector.broadcast %3 : vector<1x32xf32> to vector<8x32xf32>
    %5 = arith.addf %2, %4 : vector<8x32xf32>
    %cst_5 = arith.constant 0.000000e+00 : f32
    %6 = vector.broadcast %cst_5 : f32 to vector<8x32xf32>
    %7 = arith.maximumf %5, %6 : vector<8x32xf32>
    %8 = arith.truncf %7 : vector<8x32xf32> to vector<8x32xbf16>
    %c0_6 = arith.constant 0 : index
    %c0_7 = arith.constant 0 : index
    %9 = vector.load %arg4[%c0_6, %c0_7] : memref<32x32xbf16, #tpu.memory_space<vmem>>, vector<32x32xbf16>
    %cst_8 = arith.constant dense<0.000000e+00> : vector<8x32xf32>
    %10 = tpu.matmul %8, %9, %cst_8 {dimension_numbers = #tpu.dot_dimension_numbers<[1], [0], [0], [1], [0, 0, 1, 1], [], []>} : vector<8x32xbf16>, vector<32x32xbf16>, vector<8x32xf32> -> vector<8x32xf32>
    %c0_9 = arith.constant 0 : index
    %c0_10 = arith.constant 0 : index
    %11 = vector.load %arg5[%c0_9, %c0_10] : memref<1x32xf32, #tpu.memory_space<vmem>>, vector<1x32xf32>
    %12 = vector.broadcast %11 : vector<1x32xf32> to vector<8x32xf32>
    %13 = arith.addf %10, %12 : vector<8x32xf32>
    %cst_11 = arith.constant 0.000000e+00 : f32
    %14 = vector.broadcast %cst_11 : f32 to vector<8x32xf32>
    %15 = arith.maximumf %13, %14 : vector<8x32xf32>
    %16 = arith.truncf %15 : vector<8x32xf32> to vector<8x32xbf16>
    %c0_12 = arith.constant 0 : index
    %c0_13 = arith.constant 0 : index
    %17 = vector.load %arg6[%c0_12, %c0_13] : memref<32x32xbf16, #tpu.memory_space<vmem>>, vector<32x32xbf16>
    %cst_14 = arith.constant dense<0.000000e+00> : vector<8x32xf32>
    %18 = tpu.matmul %16, %17, %cst_14 {dimension_numbers = #tpu.dot_dimension_numbers<[1], [0], [0], [1], [0, 0, 1, 1], [], []>} : vector<8x32xbf16>, vector<32x32xbf16>, vector<8x32xf32> -> vector<8x32xf32>
    %c0_15 = arith.constant 0 : index
    %c0_16 = arith.constant 0 : index
    %19 = vector.load %arg7[%c0_15, %c0_16] : memref<1x32xf32, #tpu.memory_space<vmem>>, vector<1x32xf32>
    %20 = vector.broadcast %19 : vector<1x32xf32> to vector<8x32xf32>
    %21 = arith.addf %18, %20 : vector<8x32xf32>
    %cst_17 = arith.constant 0.000000e+00 : f32
    %22 = vector.broadcast %cst_17 : f32 to vector<8x32xf32>
    %23 = arith.maximumf %21, %22 : vector<8x32xf32>
    %24 = arith.truncf %23 : vector<8x32xf32> to vector<8x32xbf16>
    %c0_18 = arith.constant 0 : index
    %c0_19 = arith.constant 0 : index
    %25 = vector.load %arg8[%c0_18, %c0_19] : memref<32x4xbf16, #tpu.memory_space<vmem>>, vector<32x4xbf16>
    %cst_20 = arith.constant dense<0.000000e+00> : vector<8x4xf32>
    %26 = tpu.matmul %24, %25, %cst_20 {dimension_numbers = #tpu.dot_dimension_numbers<[1], [0], [0], [1], [0, 0, 1, 1], [], []>} : vector<8x32xbf16>, vector<32x4xbf16>, vector<8x4xf32> -> vector<8x4xf32>
    %c0_21 = arith.constant 0 : index
    %c0_22 = arith.constant 0 : index
    %27 = vector.load %arg9[%c0_21, %c0_22] : memref<1x4xf32, #tpu.memory_space<vmem>>, vector<1x4xf32>
    %28 = vector.broadcast %27 : vector<1x4xf32> to vector<8x4xf32>
    %29 = arith.addf %26, %28 : vector<8x4xf32>
    %c0_23 = arith.constant 0 : index
    %c0_24 = arith.constant 0 : index
    %30 = vector.load %arg10[%c0_23, %c0_24] : memref<8x4xf32, #tpu.memory_space<vmem>>, vector<8x4xf32>
    tpu.vector_store %arg10[%c0_23, %c0_24], %29 {strides = array<i32>} : memref<8x4xf32, #tpu.memory_space<vmem>>, vector<8x4xf32>,
    return
  }
  func.func @transform_0(%arg0: i32) -> (i32, i32) {
    %c0_i32 = arith.constant 0 : i32
    %c0_i32_0 = arith.constant 0 : i32
    return %arg0, %c0_i32 : i32, i32
  }
  func.func @transform_1(%arg0: i32) -> (i32, i32) {
    %c0_i32 = arith.constant 0 : i32
    %c0_i32_0 = arith.constant 0 : i32
    %c0_i32_1 = arith.constant 0 : i32
    return %c0_i32, %c0_i32_0 : i32, i32
  }
  func.func @transform_2(%arg0: i32) -> (i32, i32) {
    %c0_i32 = arith.constant 0 : i32
    %c0_i32_0 = arith.constant 0 : i32
    %c0_i32_1 = arith.constant 0 : i32
    return %c0_i32, %c0_i32_0 : i32, i32
  }
  func.func @transform_3(%arg0: i32) -> (i32, i32) {
    %c0_i32 = arith.constant 0 : i32
    %c0_i32_0 = arith.constant 0 : i32
    %c0_i32_1 = arith.constant 0 : i32
    return %c0_i32, %c0_i32_0 : i32, i32
  }
  func.func @transform_4(%arg0: i32) -> (i32, i32) {
    %c0_i32 = arith.constant 0 : i32
    %c0_i32_0 = arith.constant 0 : i32
    %c0_i32_1 = arith.constant 0 : i32
    return %c0_i32, %c0_i32_0 : i32, i32
  }
  func.func @transform_5(%arg0: i32) -> (i32, i32) {
    %c0_i32 = arith.constant 0 : i32
    %c0_i32_0 = arith.constant 0 : i32
    %c0_i32_1 = arith.constant 0 : i32
    return %c0_i32, %c0_i32_0 : i32, i32
  }
  func.func @transform_6(%arg0: i32) -> (i32, i32) {
    %c0_i32 = arith.constant 0 : i32
    %c0_i32_0 = arith.constant 0 : i32
    %c0_i32_1 = arith.constant 0 : i32
    return %c0_i32, %c0_i32_0 : i32, i32
  }
  func.func @transform_7(%arg0: i32) -> (i32, i32) {
    %c0_i32 = arith.constant 0 : i32
    %c0_i32_0 = arith.constant 0 : i32
    %c0_i32_1 = arith.constant 0 : i32
    return %c0_i32, %c0_i32_0 : i32, i32
  }
  func.func @transform_8(%arg0: i32) -> (i32, i32) {
    %c0_i32 = arith.constant 0 : i32
    %c0_i32_0 = arith.constant 0 : i32
    %c0_i32_1 = arith.constant 0 : i32
    return %c0_i32, %c0_i32_0 : i32, i32
  }
  func.func @transform_9(%arg0: i32) -> (i32, i32) {
    %c0_i32 = arith.constant 0 : i32
    %c0_i32_0 = arith.constant 0 : i32
    return %arg0, %c0_i32 : i32, i32
  }
}

</mosaic_0001>

<llo_original>
// kernel: dqn_forward.1
$region0: #{dqn_forward.1}
  #allocation0 [shape = 'u32[]', space=smem, size = 0x4, offset = 0x4, fixed_abs, tag = 'smem constant byte address 0x4 - core index']
  #allocation1 [shape = 'u32[144,128]{1,0:T(1,128)}', space=vmem, size = 0x12000, scoped, tag = 'internal scratch']
  %s0 = inlined_call_operand.vmem [shape: bf16[8,8], index: 0, kind: input, shape index: {}]
  %s1 = inlined_call_operand.vmem [shape: bf16[8,32], index: 1, kind: input, shape index: {}]
  %s2 = inlined_call_operand.vmem [shape: f32[1,32], index: 2, kind: input, shape index: {}]
  %s3 = inlined_call_operand.vmem [shape: bf16[32,32], index: 3, kind: input, shape index: {}]
  %s4 = inlined_call_operand.vmem [shape: f32[1,32], index: 4, kind: input, shape index: {}]
  %s5 = inlined_call_operand.vmem [shape: bf16[32,32], index: 5, kind: input, shape index: {}]
  %s6 = inlined_call_operand.vmem [shape: f32[1,32], index: 6, kind: input, shape index: {}]
  %s7 = inlined_call_operand.vmem [shape: bf16[32,4], index: 7, kind: input, shape index: {}]
  %s8 = inlined_call_operand.vmem [shape: f32[1,4], index: 8, kind: input, shape index: {}]
  %s9 = inlined_call_operand.vmem [shape: f32[8,4], index: 9, kind: output, shape index: {}]
  %s10 = sld [smem:[#allocation0]]
  $region46: #{dqn_forward.1} parent=0
    _
  %s12 = ssub.s32 1, %s10
  %s13 = scalar_select 0, %s12, %s10
  // Predicated region
  $region2: #{dqn_forward.1} parent=0 // pred_check
    _
  $region3: #{dqn_forward.1} parent=0 // pred_check_branch
    %15 = sbr.rel (0) target = $region5
  $region4: #{dqn_forward.1} parent=0 // pred_region
    _
  $region5: #{dqn_forward.1} parent=0 // pred_fallthru
    _
  // Predicated region
  $region6: #{dqn_forward.1} parent=0 // pred_check
    _
  $region7: #{dqn_forward.1} parent=0 // pred_check_branch
    %17 = sbr.rel (0) target = $region9
  $region8: #{dqn_forward.1} parent=0 // pred_region
    _
  $region9: #{dqn_forward.1} parent=0 // pred_fallthru
    _
  // Predicated region
  $region10: #{dqn_forward.1} parent=0 // pred_check
    _
  $region11: #{dqn_forward.1} parent=0 // pred_check_branch
    %19 = sbr.rel (0) target = $region13
  $region12: #{dqn_forward.1} parent=0 // pred_region
    _
  $region13: #{dqn_forward.1} parent=0 // pred_fallthru
    _
  // Predicated region
  $region14: #{dqn_forward.1} parent=0 // pred_check
    _
  $region15: #{dqn_forward.1} parent=0 // pred_check_branch
    %21 = sbr.rel (0) target = $region17
  $region16: #{dqn_forward.1} parent=0 // pred_region
    _
  $region17: #{dqn_forward.1} parent=0 // pred_fallthru
    _
  // Predicated region
  $region18: #{dqn_forward.1} parent=0 // pred_check
    _
  $region19: #{dqn_forward.1} parent=0 // pred_check_branch
    %23 = sbr.rel (0) target = $region21
  $region20: #{dqn_forward.1} parent=0 // pred_region
    _
  $region21: #{dqn_forward.1} parent=0 // pred_fallthru
    _
  // Predicated region
  $region22: #{dqn_forward.1} parent=0 // pred_check
    _
  $region23: #{dqn_forward.1} parent=0 // pred_check_branch
    %25 = sbr.rel (0) target = $region25
  $region24: #{dqn_forward.1} parent=0 // pred_region
    _
  $region25: #{dqn_forward.1} parent=0 // pred_fallthru
    _
  // Predicated region
  $region26: #{dqn_forward.1} parent=0 // pred_check
    _
  $region27: #{dqn_forward.1} parent=0 // pred_check_branch
    %27 = sbr.rel (0) target = $region29
  $region28: #{dqn_forward.1} parent=0 // pred_region
    _
  $region29: #{dqn_forward.1} parent=0 // pred_fallthru
    _
  // Predicated region
  $region30: #{dqn_forward.1} parent=0 // pred_check
    _
  $region31: #{dqn_forward.1} parent=0 // pred_check_branch
    %29 = sbr.rel (0) target = $region33
  $region32: #{dqn_forward.1} parent=0 // pred_region
    _
  $region33: #{dqn_forward.1} parent=0 // pred_fallthru
    _
  // Predicated region
  $region34: #{dqn_forward.1} parent=0 // pred_check
    _
  $region35: #{dqn_forward.1} parent=0 // pred_check_branch
    %31 = sbr.rel (0) target = $region37
  $region36: #{dqn_forward.1} parent=0 // pred_region
    _
  $region37: #{dqn_forward.1} parent=0 // pred_fallthru
    _
  %v33 = vld [vmem:[%s0] sm:$0xf]
  %v34 = vld [vmem:[%s1] sm:$0xf]
  %v35 = vld [vmem:[%s2] sm:$0x1]
  %v37 = vlaneseq
  %v38 = vshrl.u32 %v37, 7
  %v39 = vsub.s32 0, %v38
  %v40 = vrot.slane %v35, %v39
  %vm42 = vcmask 64512
  %v44 = vsel %vm42, %v33, 0
  %vm46 = vcmask 1043456
  %v48 = vsel %vm46, %v34, 0
  %50 = vmatprep.subr.bf16.mxu0 0
  %51 = vmatpush1.bf16.msra.mxu0 0
  %52 = vmatprep.subr.bf16.mxu0 0
  %53 = vmatpush1.bf16.msra.mxu0 0
  %54 = vmatprep.subr.bf16.mxu0 0
  %55 = vmatpush1.bf16.msra.mxu0 0
  %56 = vmatprep.subr.bf16.mxu0 0
  %57 = vmatpush1.bf16.msra.mxu0 0
  %58 = vmatprep.subr.bf16.mxu0 0
  %59 = vmatpush1.bf16.msra.mxu0 0
  %60 = vmatprep.subr.bf16.mxu0 0
  %61 = vmatpush1.bf16.msra.mxu0 0
  %62 = vmatprep.subr.bf16.mxu0 0
  %63 = vmatpush1.bf16.msra.mxu0 0
  %64 = vmatprep.subr.bf16.mxu0 0
  %65 = vmatpush1.bf16.msra.mxu0 %v48
  %66 = vmatprep.subr.bf16.mxu0 0
  %67 = vmatpush2.bf16.msra.mxu0 0
  %68 = vmatprep.subr.bf16.mxu0 0
  %69 = vmatpush2.bf16.msra.mxu0 0
  %70 = vmatprep.subr.bf16.mxu0 0
  %71 = vmatpush2.bf16.msra.mxu0 0
  %72 = vmatprep.subr.bf16.mxu0 0
  %73 = vmatpush2.bf16.msra.mxu0 0
  %74 = vmatprep.subr.bf16.mxu0 0
  %75 = vmatpush2.bf16.msra.mxu0 0
  %76 = vmatprep.subr.bf16.mxu0 0
  %77 = vmatpush2.bf16.msra.mxu0 0
  %78 = vmatprep.subr.bf16.mxu0 0
  %79 = vmatpush2.bf16.msra.mxu0 0
  %80 = vmatprep.subr.bf16.mxu0 0
  %81 = vmatpush2.bf16.msra.mxu0 0
  %82 = vmatprep.mubr.bf16.mxu0 0
  %83 = vmatmul.mubr.bf16.gmra.mxu0 %v44
  %v84 = vpop.f32.mrf.mxu0
  %v85 = vadd.f32 %v40, %v84
  %v86 = vpop.f32.mrf.mxu0
  %v87 = vpop.f32.mrf.mxu0
  %v88 = vpop.f32.mrf.mxu0
  %89 = vdwg.mxu0
  %v90 = vmax.f32 %v85, 0.0
  %v91 = vpack.c.bf16 %v90, %v90
  %v92 = vld [vmem:[%s3] sm:$0xf]
  %v93 = vld [vmem:[%s3 + $0x4] sm:$0xf]
  %v94 = vld [vmem:[%s3 + $0x8] sm:$0xf]
  %v95 = vld [vmem:[%s3 + $0xc] sm:$0xf]
  %v96 = vld [vmem:[%s4] sm:$0x1]
  %v98 = vlaneseq
  %v99 = vshrl.u32 %v98, 7
  %v100 = vsub.s32 0, %v99
  %v101 = vrot.slane %v96, %v100
  %v107 = vunpack.c.l.b16 %v92
  %v108 = vunpack.c.l.b16 %v93
  %v109 = vunpack.c.l.b16 %v94
  %v110 = vunpack.c.l.b16 %v95
  %v111 = vpack.c.b16 %v108, %v107
  %v112 = vpack.c.b16 %v110, %v109
  %vm115 = vcmask 261120
  %v117 = vsel %vm115, %v91, 0
  %119 = vmatprep.subr.bf16.mxu0 0
  %120 = vmatpush1.bf16.msra.mxu0 0
  %121 = vmatprep.subr.bf16.mxu0 0
  %122 = vmatpush1.bf16.msra.mxu0 0
  %123 = vmatprep.subr.bf16.mxu0 0
  %124 = vmatpush1.bf16.msra.mxu0 0
  %125 = vmatprep.subr.bf16.mxu0 0
  %126 = vmatpush1.bf16.msra.mxu0 0
  %127 = vmatprep.subr.bf16.mxu0 0
  %128 = vmatpush1.bf16.msra.mxu0 0
  %129 = vmatprep.subr.bf16.mxu0 0
  %130 = vmatpush1.bf16.msra.mxu0 0
  %131 = vmatprep.subr.bf16.mxu0 0
  %132 = vmatpush1.bf16.msra.mxu0 %v112
  %133 = vmatprep.subr.bf16.mxu0 0
  %134 = vmatpush1.bf16.msra.mxu0 %v111
  %135 = vmatprep.subr.bf16.mxu0 0
  %136 = vmatpush2.bf16.msra.mxu0 0
  %137 = vmatprep.subr.bf16.mxu0 0
  %138 = vmatpush2.bf16.msra.mxu0 0
  %139 = vmatprep.subr.bf16.mxu0 0
  %140 = vmatpush2.bf16.msra.mxu0 0
  %141 = vmatprep.subr.bf16.mxu0 0
  %142 = vmatpush2.bf16.msra.mxu0 0
  %143 = vmatprep.subr.bf16.mxu0 0
  %144 = vmatpush2.bf16.msra.mxu0 0
  %145 = vmatprep.subr.bf16.mxu0 0
  %146 = vmatpush2.bf16.msra.mxu0 0
  %147 = vmatprep.subr.bf16.mxu0 0
  %148 = vmatpush2.bf16.msra.mxu0 0
  %149 = vmatprep.subr.bf16.mxu0 0
  %150 = vmatpush2.bf16.msra.mxu0 0
  %151 = vmatprep.mubr.bf16.mxu0 0
  %152 = vmatmul.mubr.bf16.gmra.mxu0 %v117
  %v153 = vpop.f32.mrf.mxu0
  %v154 = vadd.f32 %v101, %v153
  %v155 = vpop.f32.mrf.mxu0
  %v156 = vpop.f32.mrf.mxu0
  %v157 = vpop.f32.mrf.mxu0
  %158 = vdwg.mxu0
  %v159 = vmax.f32 %v154, 0.0
  %v160 = vpack.c.bf16 %v159, %v159
  %v161 = vld [vmem:[%s5] sm:$0xf]
  %v162 = vld [vmem:[%s5 + $0x4] sm:$0xf]
  %v163 = vld [vmem:[%s5 + $0x8] sm:$0xf]
  %v164 = vld [vmem:[%s5 + $0xc] sm:$0xf]
  %v165 = vld [vmem:[%s6] sm:$0x1]
  %v167 = vlaneseq
  %v168 = vshrl.u32 %v167, 7
  %v169 = vsub.s32 0, %v168
  %v170 = vrot.slane %v165, %v169
  %v176 = vunpack.c.l.b16 %v161
  %v177 = vunpack.c.l.b16 %v162
  %v178 = vunpack.c.l.b16 %v163
  %v179 = vunpack.c.l.b16 %v164
  %v180 = vpack.c.b16 %v177, %v176
  %v181 = vpack.c.b16 %v179, %v178
  %v185 = vsel %vm115, %v160, 0
  %187 = vmatprep.subr.bf16.mxu0 0
  %188 = vmatpush1.bf16.msra.mxu0 0
  %189 = vmatprep.subr.bf16.mxu0 0
  %190 = vmatpush1.bf16.msra.mxu0 0
  %191 = vmatprep.subr.bf16.mxu0 0
  %192 = vmatpush1.bf16.msra.mxu0 0
  %193 = vmatprep.subr.bf16.mxu0 0
  %194 = vmatpush1.bf16.msra.mxu0 0
  %195 = vmatprep.subr.bf16.mxu0 0
  %196 = vmatpush1.bf16.msra.mxu0 0
  %197 = vmatprep.subr.bf16.mxu0 0
  %198 = vmatpush1.bf16.msra.mxu0 0
  %199 = vmatprep.subr.bf16.mxu0 0
  %200 = vmatpush1.bf16.msra.mxu0 %v181
  %201 = vmatprep.subr.bf16.mxu0 0
  %202 = vmatpush1.bf16.msra.mxu0 %v180
  %203 = vmatprep.subr.bf16.mxu0 0
  %204 = vmatpush2.bf16.msra.mxu0 0
  %205 = vmatprep.subr.bf16.mxu0 0
  %206 = vmatpush2.bf16.msra.mxu0 0
  %207 = vmatprep.subr.bf16.mxu0 0
  %208 = vmatpush2.bf16.msra.mxu0 0
  %209 = vmatprep.subr.bf16.mxu0 0
  %210 = vmatpush2.bf16.msra.mxu0 0
  %211 = vmatprep.subr.bf16.mxu0 0
  %212 = vmatpush2.bf16.msra.mxu0 0
  %213 = vmatprep.subr.bf16.mxu0 0
  %214 = vmatpush2.bf16.msra.mxu0 0
  %215 = vmatprep.subr.bf16.mxu0 0
  %216 = vmatpush2.bf16.msra.mxu0 0
  %217 = vmatprep.subr.bf16.mxu0 0
  %218 = vmatpush2.bf16.msra.mxu0 0
  %219 = vmatprep.mubr.bf16.mxu0 0
  %220 = vmatmul.mubr.bf16.gmra.mxu0 %v185
  %v221 = vpop.f32.mrf.mxu0
  %v222 = vadd.f32 %v170, %v221
  %v223 = vpop.f32.mrf.mxu0
  %v224 = vpop.f32.mrf.mxu0
  %v225 = vpop.f32.mrf.mxu0
  %226 = vdwg.mxu0
  %v227 = vmax.f32 %v222, 0.0
  %v228 = vpack.c.bf16 %v227, %v227
  %v229 = vld [vmem:[%s7] sm:$0xf]
  %v230 = vld [vmem:[%s7 + $0x4] sm:$0xf]
  %v231 = vld [vmem:[%s7 + $0x8] sm:$0xf]
  %v232 = vld [vmem:[%s7 + $0xc] sm:$0xf]
  %v233 = vld [vmem:[%s8] sm:$0x1]
  %v235 = vlaneseq
  %v236 = vshrl.u32 %v235, 7
  %v237 = vsub.s32 0, %v236
  %v238 = vrot.slane %v233, %v237
  %v244 = vunpack.c.l.b16 %v229
  %v245 = vunpack.c.l.b16 %v230
  %v246 = vunpack.c.l.b16 %v231
  %v247 = vunpack.c.l.b16 %v232
  %v248 = vpack.c.b16 %v245, %v244
  %v249 = vpack.c.b16 %v247, %v246
  %v253 = vsel %vm115, %v228, 0
  %255 = vmatprep.subr.bf16.mxu0 0
  %256 = vmatpush1.bf16.msra.mxu0 0
  %257 = vmatprep.subr.bf16.mxu0 0
  %258 = vmatpush1.bf16.msra.mxu0 0
  %259 = vmatprep.subr.bf16.mxu0 0
  %260 = vmatpush1.bf16.msra.mxu0 0
  %261 = vmatprep.subr.bf16.mxu0 0
  %262 = vmatpush1.bf16.msra.mxu0 0
  %263 = vmatprep.subr.bf16.mxu0 0
  %264 = vmatpush1.bf16.msra.mxu0 0
  %265 = vmatprep.subr.bf16.mxu0 0
  %266 = vmatpush1.bf16.msra.mxu0 0
  %267 = vmatprep.subr.bf16.mxu0 0
  %268 = vmatpush1.bf16.msra.mxu0 %v249
  %269 = vmatprep.subr.bf16.mxu0 0
  %270 = vmatpush1.bf16.msra.mxu0 %v248
  %271 = vmatprep.subr.bf16.mxu0 0
  %272 = vmatpush2.bf16.msra.mxu0 0
  %273 = vmatprep.subr.bf16.mxu0 0
  %274 = vmatpush2.bf16.msra.mxu0 0
  %275 = vmatprep.subr.bf16.mxu0 0
  %276 = vmatpush2.bf16.msra.mxu0 0
  %277 = vmatprep.subr.bf16.mxu0 0
  %278 = vmatpush2.bf16.msra.mxu0 0
  %279 = vmatprep.subr.bf16.mxu0 0
  %280 = vmatpush2.bf16.msra.mxu0 0
  %281 = vmatprep.subr.bf16.mxu0 0
  %282 = vmatpush2.bf16.msra.mxu0 0
  %283 = vmatprep.subr.bf16.mxu0 0
  %284 = vmatpush2.bf16.msra.mxu0 0
  %285 = vmatprep.subr.bf16.mxu0 0
  %286 = vmatpush2.bf16.msra.mxu0 0
  %287 = vmatprep.mubr.bf16.mxu0 0
  %288 = vmatmul.mubr.bf16.gmra.mxu0 %v253
  %v289 = vpop.f32.mrf.mxu0
  %v290 = vadd.f32 %v238, %v289
  %v291 = vpop.f32.mrf.mxu0
  %v292 = vpop.f32.mrf.mxu0
  %v293 = vpop.f32.mrf.mxu0
  %294 = vdwg.mxu0
  %vm295 = vcmask 31744
  %296 = vst.msk [vmem:[%s9] sm:$0xff] %vm295, %v290
  // Predicated region
  $region38: #{dqn_forward.1} parent=0 // pred_check
    _
  $region39: #{dqn_forward.1} parent=0 // pred_check_branch
    %298 = sbr.rel (0) target = $region41
  $region40: #{dqn_forward.1} parent=0 // pred_region
    _
  $region41: #{dqn_forward.1} parent=0 // pred_fallthru
    _
  // Predicated region
  $region42: #{dqn_forward.1} parent=0 // pred_check
    _
  $region43: #{dqn_forward.1} parent=0 // pred_check_branch
    %300 = sbr.rel (0) target = $region45
  $region44: #{dqn_forward.1} parent=0 // pred_region
    _
  $region45: #{dqn_forward.1} parent=0 // pred_fallthru
    _

</llo_original>
